<compile_context>
chip_gen: v7x
topology: tpu7x:2x2x1
jax: 0.10.0
libtpu: 0.0.40
codegen_flags: <defaults>
</compile_context>

<pallas_src>
from typing import NamedTuple

import jax
import jax.numpy as jnp
from jax.experimental import pallas as pl
from jax.experimental.pallas import tpu as pltpu

_MIB = 1024 * 1024


def _round_up(a, b):
    return (a + b - 1) // b * b


# ---------------------------------------------------------------------------
# Kernels
# ---------------------------------------------------------------------------
def ffn_resident_kernel(x_ref, w1_ref, b1_ref, w2_ref, b2_ref, o_ref):
    """Whole d_ff resident in VMEM.  x_ref: (tm, dmp) in the caller's dtype."""
    x = x_ref[...].astype(w1_ref.dtype)
    h = jnp.dot(x, w1_ref[...], preferred_element_type=jnp.float32)
    # Fused bias + ReLU + cast of the hidden tile (no extra (tm, dfp) temps).
    h = jnp.maximum(h + b1_ref[...], 0.0).astype(w2_ref.dtype)
    # TODO(synk): dropout omitted (identity in eval / inference mode).
    y = jnp.dot(h, w2_ref[...], preferred_element_type=jnp.float32)
    o_ref[...] = (y + b2_ref[...]).astype(o_ref.dtype)


def ffn_streamed_kernel(x_ref, w1_ref, b1_ref, w2_ref, b2_ref, o_ref, acc_ref):
    """d_ff tiled along the trailing reduction grid axis.

    x_ref: (tm, dmp) (resident across k); w1_ref: (dmp, tf); b1_ref: (1, tf);
    w2_ref: (tf, dmp); b2_ref: (1, dmp); acc_ref: (tm, dmp) f32 scratch.
    """
    k = pl.program_id(1)

    @pl.when(k == 0)
    def _init():
        # Initialise the accumulator with the output bias (saves the final
        # (tm, dmp) VPU add at finalisation time).
        acc_ref[...] = jnp.broadcast_to(b2_ref[...], acc_ref.shape).astype(
            jnp.float32)

    x = x_ref[...].astype(w1_ref.dtype)
    h = jnp.dot(x, w1_ref[...], preferred_element_type=jnp.float32)
    h = jnp.maximum(h + b1_ref[...], 0.0).astype(w2_ref.dtype)
    # TODO(synk): dropout omitted (identity in eval / inference mode).
    acc_ref[...] += jnp.dot(h, w2_ref[...], preferred_element_type=jnp.float32)

    @pl.when(k == pl.num_programs(1) - 1)
    def _finalize():
        o_ref[...] = acc_ref[...].astype(o_ref.dtype)


# ---------------------------------------------------------------------------
# VMEM budgeting helpers (generation-aware)
# ---------------------------------------------------------------------------
def _vmem_caps():
    """Physical per-core VMEM capacity and the working-set budget we allow."""
    try:
        cap = int(pltpu.get_tpu_info().vmem_capacity_bytes)
    except Exception:
        cap = 64 * _MIB                      # conservative (v7x per-TC)
    budget = max(24 * _MIB, cap - 16 * _MIB)  # leave compiler/DMA headroom
    return cap, budget


def _vmem_limit(cap, need):
    return int(min(cap, max(32 * _MIB, min(cap - 2 * _MIB, need + 12 * _MIB))))


def _resident_need(tm, dmp, dfp, xd, od, wd, weight_bufs):
    """Approximate VMEM working set of the resident-weight kernel (bytes)."""
    return (2 * tm * dmp * xd                    # x row tile (double-buffered)
            + 2 * tm * dmp * od                  # out row tile (double-buffered)
            + weight_bufs * 2 * dmp * dfp * wd   # w1 + w2
            + weight_bufs * 8 * (dfp + dmp) * 4  # biases (sublane-padded)
            + tm * dmp * wd                      # in-kernel x cast
            + tm * dfp * (4 + wd)                # hidden tile f32 + compute dtype
            + tm * dmp * 4)                      # second matmul f32 result


def _streamed_need(tm, tf, dmp, xd, od, wd):
    """Approximate VMEM working set of the d_ff-tiled kernel (bytes)."""
    return (2 * tm * dmp * xd                    # x row tile
            + 2 * tm * dmp * od                  # out row tile
            + tm * dmp * 4                       # f32 accumulator scratch
            + 2 * 2 * dmp * tf * wd              # w1/w2 chunks (double-buffered)
            + 2 * 8 * (tf + dmp) * 4             # bias chunks
            + tm * dmp * wd                      # in-kernel x cast
            + tm * tf * (4 + wd))                # hidden chunk f32 + compute dtype


def _pad_rows_feats(x2d, Np, dmp):
    N, d_model = x2d.shape
    if Np != N or dmp != d_model:
        x2d = jnp.pad(x2d, ((0, Np - N), (0, dmp - d_model)))
    return x2d


# ---------------------------------------------------------------------------
# Parameter preparation (hoisted out of the per-forward path)
# ---------------------------------------------------------------------------
class FFNParams(NamedTuple):
    w1: jax.Array     # (dmp, dfp) compute dtype (transposed vs. PyTorch)
    b1: jax.Array     # (1, dfp) f32
    w2: jax.Array     # (dfp, dmp) compute dtype
    b2: jax.Array     # (1, dmp) f32
    d_model: int
    d_ff: int


def prepare_ffn_params(w1, b1, w2, b2, *, compute_dtype=jnp.bfloat16):
    """Pad feature dims to multiples of 128 and cast to the MXU dtype ONCE."""
    d_model, d_ff = w1.shape
    dmp = _round_up(d_model, 128)
    dfp = _round_up(d_ff, 128)
    w1p = jnp.pad(w1, ((0, dmp - d_model), (0, dfp - d_ff))).astype(compute_dtype)
    w2p = jnp.pad(w2, ((0, dfp - d_ff), (0, dmp - d_model))).astype(compute_dtype)
    b1p = jnp.pad(b1, (0, dfp - d_ff)).reshape(1, dfp).astype(jnp.float32)
    b2p = jnp.pad(b2, (0, dmp - d_model)).reshape(1, dmp).astype(jnp.float32)
    return FFNParams(w1p, b1p, w2p, b2p, int(d_model), int(d_ff))


# ---------------------------------------------------------------------------
# Forward paths
# ---------------------------------------------------------------------------
def _forward_resident(x, p, out_dtype, *, single_buffer, cap):
    B, S, d_model = x.shape
    dmp, dfp = p.w1.shape
    N = B * S
    xd = jnp.dtype(x.dtype).itemsize
    od = jnp.dtype(out_dtype).itemsize
    wd = jnp.dtype(p.w1.dtype).itemsize

    # 256 rows keep the MXU busy when weights are only read from HBM once.
    tm = max(16, min(256, _round_up(N, 16)))
    Np = _round_up(N, tm)
    x2d = _pad_rows_feats(x.reshape(N, d_model), Np, dmp)

    need = _resident_need(tm, dmp, dfp, xd, od, wd,
                          weight_bufs=1 if single_buffer else 2)
    cost = pl.CostEstimate(
        flops=4 * N * d_model * p.d_ff,
        transcendentals=0,
        bytes_accessed=int(N * d_model * (xd + od)
                           + (p.w1.size + p.w2.size) * wd
                           + (p.b1.size + p.b2.size) * 4),
    )
    resident = ({"pipeline_mode": pl.Buffered(buffer_count=1)}
                if single_buffer else {})
    out2d = pl.pallas_call(
        ffn_resident_kernel,
        out_shape=jax.ShapeDtypeStruct((Np, dmp), out_dtype),
        grid_spec=pltpu.PrefetchScalarGridSpec(
            num_scalar_prefetch=0,
            grid=(Np // tm,),
            in_specs=[
                pl.BlockSpec((tm, dmp), lambda i: (i, 0)),               # x
                pl.BlockSpec((dmp, dfp), lambda i: (0, 0), **resident),  # w1
                pl.BlockSpec((1, dfp), lambda i: (0, 0), **resident),    # b1
                pl.BlockSpec((dfp, dmp), lambda i: (0, 0), **resident),  # w2
                pl.BlockSpec((1, dmp), lambda i: (0, 0), **resident),    # b2
            ],
            out_specs=pl.BlockSpec((tm, dmp), lambda i: (i, 0)),
        ),
        compiler_params=pltpu.CompilerParams(
            dimension_semantics=("parallel",),
            vmem_limit_bytes=_vmem_limit(cap, need),
        ),
        cost_estimate=cost,
    )(x2d, p.w1, p.b1, p.w2, p.b2)
    return out2d[:N, :d_model].reshape(B, S, d_model)


def _forward_streamed(x, p, out_dtype, *, budget, cap):
    B, S, d_model = x.shape
    dmp, dfp = p.w1.shape
    N = B * S
    xd = jnp.dtype(x.dtype).itemsize
    od = jnp.dtype(out_dtype).itemsize
    wd = jnp.dtype(p.w1.dtype).itemsize

    # Lane-dense d_ff chunk that divides the padded d_ff.
    tf = next(t for t in (512, 256, 128) if dfp % t == 0)
    # Streamed weights are re-fetched once per row tile, so arithmetic
    # intensity = tm FLOP / weight byte.  Prefer tm >= 640 (v6e/v7x roofline
    # ~620-655 FLOP/B), subject to the per-generation VMEM budget.
    tm = 128
    for cand in (1024, 768, 640, 512, 384, 256, 128):
        if _streamed_need(cand, tf, dmp, xd, od, wd) <= budget:
            tm = cand
            break
    tm = max(16, min(tm, _round_up(N, 16)))
    Np = _round_up(N, tm)
    x2d = _pad_rows_feats(x.reshape(N, d_model), Np, dmp)

    row_tiles = Np // tm
    need = _streamed_need(tm, tf, dmp, xd, od, wd)
    cost = pl.CostEstimate(
        flops=4 * N * d_model * p.d_ff,
        transcendentals=0,
        bytes_accessed=int(N * d_model * (xd + od)
                           + row_tiles * ((p.w1.size + p.w2.size) * wd
                                          + (p.b1.size + p.b2.size) * 4)),
    )
    out2d = pl.pallas_call(
        ffn_streamed_kernel,
        out_shape=jax.ShapeDtypeStruct((Np, dmp), out_dtype),
        grid_spec=pltpu.PrefetchScalarGridSpec(
            num_scalar_prefetch=0,
            grid=(row_tiles, dfp // tf),        # rows parallel, d_ff reduction last
            in_specs=[
                pl.BlockSpec((tm, dmp), lambda i, k: (i, 0)),   # x (resident over k)
                pl.BlockSpec((dmp, tf), lambda i, k: (0, k)),   # w1 chunk
                pl.BlockSpec((1, tf), lambda i, k: (0, k)),     # b1 chunk
                pl.BlockSpec((tf, dmp), lambda i, k: (k, 0)),   # w2 chunk
                pl.BlockSpec((1, dmp), lambda i, k: (0, 0)),    # b2
            ],
            out_specs=pl.BlockSpec((tm, dmp), lambda i, k: (i, 0)),
            scratch_shapes=[pltpu.VMEM((tm, dmp), jnp.float32)],
        ),
        compiler_params=pltpu.CompilerParams(
            dimension_semantics=("parallel", "arbitrary"),
            vmem_limit_bytes=_vmem_limit(cap, need),
        ),
        cost_estimate=cost,
    )(x2d, p.w1, p.b1, p.w2, p.b2)
    return out2d[:N, :d_model].reshape(B, S, d_model)


def positionwise_ffn(x, params, *, out_dtype=None):
    """FFN forward: relu(x @ w1 + b1) @ w2 + b2 (dropout = identity, eval mode).

    x: (batch, seq, d_model).  `params` from prepare_ffn_params (weights stored
    transposed vs. PyTorch, padded + cast to bf16 once).  Matmuls run in bf16
    on the MXU with f32 accumulation (~1e-2 deviation from pure f32).
    """
    B, S, d_model = x.shape
    if d_model != params.d_model:
        raise ValueError(f"d_model mismatch: {d_model} vs {params.d_model}")
    out_dtype = x.dtype if out_dtype is None else jnp.dtype(out_dtype)

    dmp, dfp = params.w1.shape
    N = B * S
    xd = jnp.dtype(x.dtype).itemsize
    od = jnp.dtype(out_dtype).itemsize
    wd = jnp.dtype(params.w1.dtype).itemsize

    cap, budget = _vmem_caps()
    tm_res = max(16, min(256, _round_up(N, 16)))

    if _resident_need(tm_res, dmp, dfp, xd, od, wd, weight_bufs=1) <= budget:
        try:
            return _forward_resident(x, params, out_dtype,
                                     single_buffer=True, cap=cap)
        except Exception:
            # This Pallas build rejected Buffered(1): retry with default
            # double-buffered resident weights only if they still fit the
            # budget; otherwise fall through to the streamed variant.
            if _resident_need(tm_res, dmp, dfp, xd, od, wd,
                              weight_bufs=2) <= budget:
                return _forward_resident(x, params, out_dtype,
                                         single_buffer=False, cap=cap)
    return _forward_streamed(x, params, out_dtype, budget=budget, cap=cap)


if __name__ == "__main__":
    # Small shapes consistent with the module: batch=2, seq=8, d_model=32, d_ff=64
    B, S, d_model, d_ff = 2, 8, 32, 64
    key = jax.random.PRNGKey(0)
    kx, k1, k2, k3, k4 = jax.random.split(key, 5)

    x = jax.random.normal(kx, (B, S, d_model), dtype=jnp.float32)

    # Deterministic parameter init (uniform, matching nn.Linear's fan-in bound).
    bound1 = 1.0 / (d_model ** 0.5)
    w1 = jax.random.uniform(k1, (d_model, d_ff), jnp.float32, -bound1, bound1)
    b1 = jax.random.uniform(k2, (d_ff,), jnp.float32, -bound1, bound1)
    bound2 = 1.0 / (d_ff ** 0.5)
    w2 = jax.random.uniform(k3, (d_ff, d_model), jnp.float32, -bound2, bound2)
    b2 = jax.random.uniform(k4, (d_model,), jnp.float32, -bound2, bound2)

    # Weight pad + bf16 cast hoisted out of the per-forward path.
    params = prepare_ffn_params(w1, b1, w2, b2)

    # Default dispatch (resident path at these shapes).
    out = jax.block_until_ready(positionwise_ffn(x, params))
    assert out.shape == (B, S, d_model)

    # Also exercise the d_ff-tiled (streamed) path explicitly.
    cap, budget = _vmem_caps()
    out_streamed = jax.block_until_ready(
        _forward_streamed(x, params, x.dtype, budget=budget, cap=cap))

    # Reference using the same bf16-operand / f32-accumulate math as the kernel.
    xb = x.astype(jnp.bfloat16).reshape(-1, d_model)
    w1b, w2b = w1.astype(jnp.bfloat16), w2.astype(jnp.bfloat16)
    h_ref = jnp.maximum(
        jnp.dot(xb, w1b, preferred_element_type=jnp.float32) + b1, 0.0)
    ref = (jnp.dot(h_ref.astype(jnp.bfloat16), w2b,
                   preferred_element_type=jnp.float32) + b2).reshape(B, S, d_model)
    assert jnp.allclose(out, ref, atol=2e-3, rtol=2e-3), \
        float(jnp.max(jnp.abs(out - ref)))
    assert jnp.allclose(out_streamed, ref, atol=2e-3, rtol=2e-3), \
        float(jnp.max(jnp.abs(out_streamed - ref)))

    # Loose check against the pure-f32 PyTorch-equivalent forward (bf16 tolerance).
    ref_f32 = jnp.maximum(x @ w1 + b1, 0.0) @ w2 + b2
    assert jnp.allclose(out, ref_f32, atol=5e-2, rtol=5e-2), \
        float(jnp.max(jnp.abs(out - ref_f32)))

    print("KERNEL_OK")
</pallas_src>

<mosaic_0001>
module attributes {stable_mosaic.version = 11 : i64} {
  func.func @ffn_resident_kernel(%arg0: i32, %arg1: memref<16x128xf32, #tpu.memory_space<vmem>>, %arg2: memref<128x128xbf16, #tpu.memory_space<vmem>>, %arg3: memref<1x128xf32, #tpu.memory_space<vmem>>, %arg4: memref<128x128xbf16, #tpu.memory_space<vmem>>, %arg5: memref<1x128xf32, #tpu.memory_space<vmem>>, %arg6: memref<16x128xf32, #tpu.memory_space<vmem>>) attributes {dimension_semantics = [#tpu.dimension_semantics<parallel>], iteration_bounds = array<i64: 1>, scalar_prefetch = 0 : i64, scratch_operands = 0 : i64, tpu.core_type = #tpu.core_type<tc>, window_params = [{transform_indices = @transform_0, window_bounds = array<i64: 16, 128>}, {pipeline_mode = #tpu.pipeline_mode<synchronous>, transform_indices = @transform_1, window_bounds = array<i64: 128, 128>}, {pipeline_mode = #tpu.pipeline_mode<synchronous>, transform_indices = @transform_2, window_bounds = array<i64: 1, 128>}, {pipeline_mode = #tpu.pipeline_mode<synchronous>, transform_indices = @transform_3, window_bounds = array<i64: 128, 128>}, {pipeline_mode = #tpu.pipeline_mode<synchronous>, transform_indices = @transform_4, window_bounds = array<i64: 1, 128>}, {transform_indices = @transform_5, window_bounds = array<i64: 16, 128>}]} {
    %c0 = arith.constant 0 : index
    %c0_0 = arith.constant 0 : index
    %0 = vector.load %arg1[%c0, %c0_0] : memref<16x128xf32, #tpu.memory_space<vmem>>, vector<16x128xf32>
    %1 = arith.truncf %0 : vector<16x128xf32> to vector<16x128xbf16>
    %c0_1 = arith.constant 0 : index
    %c0_2 = arith.constant 0 : index
    %2 = vector.load %arg2[%c0_1, %c0_2] : memref<128x128xbf16, #tpu.memory_space<vmem>>, vector<128x128xbf16>
    %cst = arith.constant dense<0.000000e+00> : vector<16x128xf32>
    %3 = tpu.matmul %1, %2, %cst {dimension_numbers = #tpu.dot_dimension_numbers<[1], [0], [0], [1], [0, 0, 1, 1], [], []>} : vector<16x128xbf16>, vector<128x128xbf16>, vector<16x128xf32> -> vector<16x128xf32>
    %c0_3 = arith.constant 0 : index
    %c0_4 = arith.constant 0 : index
    %4 = vector.load %arg3[%c0_3, %c0_4] : memref<1x128xf32, #tpu.memory_space<vmem>>, vector<1x128xf32>
    %5 = vector.broadcast %4 : vector<1x128xf32> to vector<16x128xf32>
    %6 = arith.addf %3, %5 : vector<16x128xf32>
    %cst_5 = arith.constant 0.000000e+00 : f32
    %7 = vector.broadcast %cst_5 : f32 to vector<16x128xf32>
    %8 = arith.maximumf %6, %7 : vector<16x128xf32>
    %9 = arith.truncf %8 : vector<16x128xf32> to vector<16x128xbf16>
    %c0_6 = arith.constant 0 : index
    %c0_7 = arith.constant 0 : index
    %10 = vector.load %arg4[%c0_6, %c0_7] : memref<128x128xbf16, #tpu.memory_space<vmem>>, vector<128x128xbf16>
    %cst_8 = arith.constant dense<0.000000e+00> : vector<16x128xf32>
    %11 = tpu.matmul %9, %10, %cst_8 {dimension_numbers = #tpu.dot_dimension_numbers<[1], [0], [0], [1], [0, 0, 1, 1], [], []>} : vector<16x128xbf16>, vector<128x128xbf16>, vector<16x128xf32> -> vector<16x128xf32>
    %c0_9 = arith.constant 0 : index
    %c0_10 = arith.constant 0 : index
    %12 = vector.load %arg5[%c0_9, %c0_10] : memref<1x128xf32, #tpu.memory_space<vmem>>, vector<1x128xf32>
    %13 = vector.broadcast %12 : vector<1x128xf32> to vector<16x128xf32>
    %14 = arith.addf %11, %13 : vector<16x128xf32>
    %c0_11 = arith.constant 0 : index
    %c0_12 = arith.constant 0 : index
    %15 = vector.load %arg6[%c0_11, %c0_12] : memref<16x128xf32, #tpu.memory_space<vmem>>, vector<16x128xf32>
    tpu.vector_store %arg6[%c0_11, %c0_12], %14 {strides = array<i32>} : memref<16x128xf32, #tpu.memory_space<vmem>>, vector<16x128xf32>,
    return
  }
  func.func @transform_0(%arg0: i32) -> (i32, i32) {
    %c0_i32 = arith.constant 0 : i32
    %c0_i32_0 = arith.constant 0 : i32
    return %arg0, %c0_i32 : i32, i32
  }
  func.func @transform_1(%arg0: i32) -> (i32, i32) {
    %c0_i32 = arith.constant 0 : i32
    %c0_i32_0 = arith.constant 0 : i32
    %c0_i32_1 = arith.constant 0 : i32
    return %c0_i32, %c0_i32_0 : i32, i32
  }
  func.func @transform_2(%arg0: i32) -> (i32, i32) {
    %c0_i32 = arith.constant 0 : i32
    %c0_i32_0 = arith.constant 0 : i32
    %c0_i32_1 = arith.constant 0 : i32
    return %c0_i32, %c0_i32_0 : i32, i32
  }
  func.func @transform_3(%arg0: i32) -> (i32, i32) {
    %c0_i32 = arith.constant 0 : i32
    %c0_i32_0 = arith.constant 0 : i32
    %c0_i32_1 = arith.constant 0 : i32
    return %c0_i32, %c0_i32_0 : i32, i32
  }
  func.func @transform_4(%arg0: i32) -> (i32, i32) {
    %c0_i32 = arith.constant 0 : i32
    %c0_i32_0 = arith.constant 0 : i32
    %c0_i32_1 = arith.constant 0 : i32
    return %c0_i32, %c0_i32_0 : i32, i32
  }
  func.func @transform_5(%arg0: i32) -> (i32, i32) {
    %c0_i32 = arith.constant 0 : i32
    %c0_i32_0 = arith.constant 0 : i32
    return %arg0, %c0_i32 : i32, i32
  }
}

module attributes {stable_mosaic.version = 11 : i64} {
  func.func @ffn_resident_kernel(%arg0: i32, %arg1: memref<16x128xf32, #tpu.memory_space<vmem>>, %arg2: memref<128x128xbf16, #tpu.memory_space<vmem>>, %arg3: memref<1x128xf32, #tpu.memory_space<vmem>>, %arg4: memref<128x128xbf16, #tpu.memory_space<vmem>>, %arg5: memref<1x128xf32, #tpu.memory_space<vmem>>, %arg6: memref<16x128xf32, #tpu.memory_space<vmem>>) attributes {dimension_semantics = [#tpu.dimension_semantics<parallel>], iteration_bounds = array<i64: 1>, scalar_prefetch = 0 : i64, scratch_operands = 0 : i64, tpu.core_type = #tpu.core_type<tc>, window_params = [{transform_indices = @transform_0, window_bounds = array<i64: 16, 128>}, {pipeline_mode = #tpu.pipeline_mode<synchronous>, transform_indices = @transform_1, window_bounds = array<i64: 128, 128>}, {pipeline_mode = #tpu.pipeline_mode<synchronous>, transform_indices = @transform_2, window_bounds = array<i64: 1, 128>}, {pipeline_mode = #tpu.pipeline_mode<synchronous>, transform_indices = @transform_3, window_bounds = array<i64: 128, 128>}, {pipeline_mode = #tpu.pipeline_mode<synchronous>, transform_indices = @transform_4, window_bounds = array<i64: 1, 128>}, {transform_indices = @transform_5, window_bounds = array<i64: 16, 128>}]} {
    %c0 = arith.constant 0 : index
    %c0_0 = arith.constant 0 : index
    %0 = vector.load %arg1[%c0, %c0_0] : memref<16x128xf32, #tpu.memory_space<vmem>>, vector<16x128xf32>
    %1 = arith.truncf %0 : vector<16x128xf32> to vector<16x128xbf16>
    %c0_1 = arith.constant 0 : index
    %c0_2 = arith.constant 0 : index
    %2 = vector.load %arg2[%c0_1, %c0_2] : memref<128x128xbf16, #tpu.memory_space<vmem>>, vector<128x128xbf16>
    %cst = arith.constant dense<0.000000e+00> : vector<16x128xf32>
    %3 = tpu.matmul %1, %2, %cst {dimension_numbers = #tpu.dot_dimension_numbers<[1], [0], [0], [1], [0, 0, 1, 1], [], []>} : vector<16x128xbf16>, vector<128x128xbf16>, vector<16x128xf32> -> vector<16x128xf32>
    %c0_3 = arith.constant 0 : index
    %c0_4 = arith.constant 0 : index
    %4 = vector.load %arg3[%c0_3, %c0_4] : memref<1x128xf32, #tpu.memory_space<vmem>>, vector<1x128xf32>
    %5 = vector.broadcast %4 : vector<1x128xf32> to vector<16x128xf32>
    %6 = arith.addf %3, %5 : vector<16x128xf32>
    %cst_5 = arith.constant 0.000000e+00 : f32
    %7 = vector.broadcast %cst_5 : f32 to vector<16x128xf32>
    %8 = arith.maximumf %6, %7 : vector<16x128xf32>
    %9 = arith.truncf %8 : vector<16x128xf32> to vector<16x128xbf16>
    %c0_6 = arith.constant 0 : index
    %c0_7 = arith.constant 0 : index
    %10 = vector.load %arg4[%c0_6, %c0_7] : memref<128x128xbf16, #tpu.memory_space<vmem>>, vector<128x128xbf16>
    %cst_8 = arith.constant dense<0.000000e+00> : vector<16x128xf32>
    %11 = tpu.matmul %9, %10, %cst_8 {dimension_numbers = #tpu.dot_dimension_numbers<[1], [0], [0], [1], [0, 0, 1, 1], [], []>} : vector<16x128xbf16>, vector<128x128xbf16>, vector<16x128xf32> -> vector<16x128xf32>
    %c0_9 = arith.constant 0 : index
    %c0_10 = arith.constant 0 : index
    %12 = vector.load %arg5[%c0_9, %c0_10] : memref<1x128xf32, #tpu.memory_space<vmem>>, vector<1x128xf32>
    %13 = vector.broadcast %12 : vector<1x128xf32> to vector<16x128xf32>
    %14 = arith.addf %11, %13 : vector<16x128xf32>
    %c0_11 = arith.constant 0 : index
    %c0_12 = arith.constant 0 : index
    %15 = vector.load %arg6[%c0_11, %c0_12] : memref<16x128xf32, #tpu.memory_space<vmem>>, vector<16x128xf32>
    tpu.vector_store %arg6[%c0_11, %c0_12], %14 {strides = array<i32>} : memref<16x128xf32, #tpu.memory_space<vmem>>, vector<16x128xf32>,
    return
  }
  func.func @transform_0(%arg0: i32) -> (i32, i32) {
    %c0_i32 = arith.constant 0 : i32
    %c0_i32_0 = arith.constant 0 : i32
    return %arg0, %c0_i32 : i32, i32
  }
  func.func @transform_1(%arg0: i32) -> (i32, i32) {
    %c0_i32 = arith.constant 0 : i32
    %c0_i32_0 = arith.constant 0 : i32
    %c0_i32_1 = arith.constant 0 : i32
    return %c0_i32, %c0_i32_0 : i32, i32
  }
  func.func @transform_2(%arg0: i32) -> (i32, i32) {
    %c0_i32 = arith.constant 0 : i32
    %c0_i32_0 = arith.constant 0 : i32
    %c0_i32_1 = arith.constant 0 : i32
    return %c0_i32, %c0_i32_0 : i32, i32
  }
  func.func @transform_3(%arg0: i32) -> (i32, i32) {
    %c0_i32 = arith.constant 0 : i32
    %c0_i32_0 = arith.constant 0 : i32
    %c0_i32_1 = arith.constant 0 : i32
    return %c0_i32, %c0_i32_0 : i32, i32
  }
  func.func @transform_4(%arg0: i32) -> (i32, i32) {
    %c0_i32 = arith.constant 0 : i32
    %c0_i32_0 = arith.constant 0 : i32
    %c0_i32_1 = arith.constant 0 : i32
    return %c0_i32, %c0_i32_0 : i32, i32
  }
  func.func @transform_5(%arg0: i32) -> (i32, i32) {
    %c0_i32 = arith.constant 0 : i32
    %c0_i32_0 = arith.constant 0 : i32
    return %arg0, %c0_i32 : i32, i32
  }
}

</mosaic_0001>

<llo_original>
// kernel: tpu_custom_call.1
$region0: #{tpu_custom_call.1}
  #allocation0 [shape = 'u32[]', space=smem, size = 0x4, offset = 0x4, fixed_abs, tag = 'smem constant byte address 0x4 - core index']
  #allocation1 [shape = 'u32[144,128]{1,0:T(1,128)}', space=vmem, size = 0x12000, scoped, tag = 'internal scratch']
  %s0 = inlined_call_operand.hbm [shape: f32[16,128], index: 0, kind: input, shape index: {}]
  %s1 = inlined_call_operand.hbm [shape: bf16[128,128], index: 1, kind: input, shape index: {}]
  %s2 = inlined_call_operand.vmem [shape: f32[1,128], index: 2, kind: input, shape index: {}]
  %s3 = inlined_call_operand.hbm [shape: bf16[128,128], index: 3, kind: input, shape index: {}]
  %s4 = inlined_call_operand.vmem [shape: f32[1,128], index: 4, kind: input, shape index: {}]
  %s5 = inlined_call_operand.hbm [shape: f32[16,128], index: 5, kind: output, shape index: {}]
  %s6 = sld [smem:[#allocation0]]
  $region42: #{tpu_custom_call.1} parent=0
    _
  %s8 = ssub.s32 1, %s6
  %s9 = scalar_select 0, %s8, %s6
  $region1: #{tpu_custom_call.1} parent=0
    #allocation2 [shape = 'u8[8192]{0}', space=vmem, size = 0x2000, scoped, tag = 'input window, operand 0, single buffered']
    #allocation3 [shape = 's32[1]{0}', space=sflag, size = 0x4, scoped, tag = 'scoped memory for tpu_custom_call.1']
    #allocation4 [shape = 's32[1]{0}', space=sflag, size = 0x4, scoped, tag = 'scoped memory for tpu_custom_call.1']
    #allocation5 [shape = 'u8[32768]{0}', space=vmem, size = 0x8000, scoped, tag = 'input window, operand 1, single buffered']
    #allocation6 [shape = 's32[1]{0}', space=sflag, size = 0x4, scoped, tag = 'scoped memory for tpu_custom_call.1']
    #allocation7 [shape = 'u8[32768]{0}', space=vmem, size = 0x8000, scoped, tag = 'input window, operand 3, single buffered']
    #allocation8 [shape = 'u8[8192]{0}', space=vmem, size = 0x2000, scoped, tag = 'output window, operand 0, single buffered']
    %10 = vsyncpa [#allocation3], 0
    %11 = vsyncpa [#allocation6], 0
    %12 = vsyncpa [#allocation4], 0
    // Predicated region
    $region2: #{tpu_custom_call.1} parent=1 // pred_check
      _
    $region3: #{tpu_custom_call.1} parent=1 // pred_check_branch
      %14 = sbr.rel (0) target = $region5
    $region4: #{tpu_custom_call.1} parent=1 // pred_region
      %s16 = ssub.s32 256, 256
      %17 = vsyncadd [#allocation3], %s16
      %s18 = sshll.u32 [#allocation2], 4
      %s19 = int_to_ptr.vmem [resolvable:$true] %s18
      %24 = dma.hbm_to_vmem [thread:$0]  %s0, 256, %s19, [#allocation3], 128, 128, 8
    $region5: #{tpu_custom_call.1} parent=1 // pred_fallthru
      _
    // Predicated region
    $region6: #{tpu_custom_call.1} parent=1 // pred_check
      _
    $region7: #{tpu_custom_call.1} parent=1 // pred_check_branch
      %26 = sbr.rel (0) target = $region9
    $region8: #{tpu_custom_call.1} parent=1 // pred_region
      %s28 = ssub.s32 1024, 1024
      %29 = vsyncadd [#allocation6], %s28
      %s30 = sshll.u32 [#allocation5], 4
      %s31 = int_to_ptr.vmem [resolvable:$true] %s30
      %36 = dma.hbm_to_vmem [thread:$0]  %s1, 1024, %s31, [#allocation6], 64, 64, 4
    $region9: #{tpu_custom_call.1} parent=1 // pred_fallthru
      _
    // Predicated region
    $region10: #{tpu_custom_call.1} parent=1 // pred_check
      _
    $region11: #{tpu_custom_call.1} parent=1 // pred_check_branch
      %38 = sbr.rel (0) target = $region13
    $region12: #{tpu_custom_call.1} parent=1 // pred_region
      _
    $region13: #{tpu_custom_call.1} parent=1 // pred_fallthru
      _
    // Predicated region
    $region14: #{tpu_custom_call.1} parent=1 // pred_check
      _
    $region15: #{tpu_custom_call.1} parent=1 // pred_check_branch
      %40 = sbr.rel (0) target = $region17
    $region16: #{tpu_custom_call.1} parent=1 // pred_region
      %s42 = ssub.s32 1024, 1024
      %43 = vsyncadd [#allocation6], %s42
      %s44 = sshll.u32 [#allocation7], 4
      %s45 = int_to_ptr.vmem [resolvable:$true] %s44
      %50 = dma.hbm_to_vmem [thread:$0]  %s3, 1024, %s45, [#allocation6], 64, 64, 4
    $region17: #{tpu_custom_call.1} parent=1 // pred_fallthru
      _
    // Predicated region
    $region18: #{tpu_custom_call.1} parent=1 // pred_check
      _
    $region19: #{tpu_custom_call.1} parent=1 // pred_check_branch
      %52 = sbr.rel (0) target = $region21
    $region20: #{tpu_custom_call.1} parent=1 // pred_region
      _
    $region21: #{tpu_custom_call.1} parent=1 // pred_fallthru
      _
    // Predicated region
    $region22: #{tpu_custom_call.1} parent=1 // pred_check
      _
    $region23: #{tpu_custom_call.1} parent=1 // pred_check_branch
      %54 = sbr.rel (0) target = $region25
    $region24: #{tpu_custom_call.1} parent=1 // pred_region
      %55 = dma.done [#allocation3], 256
    $region25: #{tpu_custom_call.1} parent=1 // pred_fallthru
      _
    // Predicated region
    $region26: #{tpu_custom_call.1} parent=1 // pred_check
      _
    $region27: #{tpu_custom_call.1} parent=1 // pred_check_branch
      %57 = sbr.rel (0) target = $region29
    $region28: #{tpu_custom_call.1} parent=1 // pred_region
      %58 = dma.done [#allocation6], 1024
    $region29: #{tpu_custom_call.1} parent=1 // pred_fallthru
      _
    // Predicated region
    $region30: #{tpu_custom_call.1} parent=1 // pred_check
      _
    $region31: #{tpu_custom_call.1} parent=1 // pred_check_branch
      %60 = sbr.rel (0) target = $region33
    $region32: #{tpu_custom_call.1} parent=1 // pred_region
      %61 = dma.done [#allocation6], 1024
    $region33: #{tpu_custom_call.1} parent=1 // pred_fallthru
      _
    %v63 = vld [vmem:[#allocation2] sm:$0xff]
    %v64 = vld [vmem:[#allocation2 + $0x8] sm:$0xff]
    %v65 = vpack.c.bf16 %v64, %v63
    %v66 = vld [vmem:[#allocation5] sm:$0xf]
    %v67 = vld [vmem:[#allocation5 + $0x4] sm:$0xf]
    %v68 = vld [vmem:[#allocation5 + $0x8] sm:$0xf]
    %v69 = vld [vmem:[#allocation5 + $0xc] sm:$0xf]
    %v70 = vld [vmem:[#allocation5 + $0x10] sm:$0xf]
    %v71 = vld [vmem:[#allocation5 + $0x14] sm:$0xf]
    %v72 = vld [vmem:[#allocation5 + $0x18] sm:$0xf]
    %v73 = vld [vmem:[#allocation5 + $0x1c] sm:$0xf]
    %v74 = vld [vmem:[#allocation5 + $0x20] sm:$0xf]
    %v75 = vld [vmem:[#allocation5 + $0x24] sm:$0xf]
    %v76 = vld [vmem:[#allocation5 + $0x28] sm:$0xf]
    %v77 = vld [vmem:[#allocation5 + $0x2c] sm:$0xf]
    %v78 = vld [vmem:[#allocation5 + $0x30] sm:$0xf]
    %v79 = vld [vmem:[#allocation5 + $0x34] sm:$0xf]
    %v80 = vld [vmem:[#allocation5 + $0x38] sm:$0xf]
    %v81 = vld [vmem:[#allocation5 + $0x3c] sm:$0xf]
    %v82 = vld [vmem:[%s2] sm:$0x1]
    %v84 = vlaneseq
    %v85 = vshrl.u32 %v84, 7
    %v86 = vsub.s32 0, %v85
    %v87 = vrot.slane %v82, %v86
    %v105 = vunpack.c.l.b16 %v66
    %v106 = vunpack.c.l.b16 %v67
    %v107 = vunpack.c.l.b16 %v68
    %v108 = vunpack.c.l.b16 %v69
    %v109 = vunpack.c.l.b16 %v70
    %v110 = vunpack.c.l.b16 %v71
    %v111 = vunpack.c.l.b16 %v72
    %v112 = vunpack.c.l.b16 %v73
    %v113 = vunpack.c.l.b16 %v74
    %v114 = vunpack.c.l.b16 %v75
    %v115 = vunpack.c.l.b16 %v76
    %v116 = vunpack.c.l.b16 %v77
    %v117 = vunpack.c.l.b16 %v78
    %v118 = vunpack.c.l.b16 %v79
    %v119 = vunpack.c.l.b16 %v80
    %v120 = vunpack.c.l.b16 %v81
    %v121 = vpack.c.b16 %v106, %v105
    %v122 = vpack.c.b16 %v108, %v107
    %v123 = vpack.c.b16 %v110, %v109
    %v124 = vpack.c.b16 %v112, %v111
    %v125 = vpack.c.b16 %v114, %v113
    %v126 = vpack.c.b16 %v116, %v115
    %v127 = vpack.c.b16 %v118, %v117
    %v128 = vpack.c.b16 %v120, %v119
    %137 = vmatprep.subr.bf16.mxu0 0
    %138 = vmatpush1.bf16.msra.mxu0 %v121
    %139 = vmatprep.subr.bf16.mxu0 0
    %140 = vmatpush1.bf16.msra.mxu0 %v122
    %141 = vmatprep.subr.bf16.mxu0 0
    %142 = vmatpush1.bf16.msra.mxu0 %v123
    %143 = vmatprep.subr.bf16.mxu0 0
    %144 = vmatpush1.bf16.msra.mxu0 %v124
    %145 = vmatprep.subr.bf16.mxu0 0
    %146 = vmatpush1.bf16.msra.mxu0 %v125
    %147 = vmatprep.subr.bf16.mxu0 0
    %148 = vmatpush1.bf16.msra.mxu0 %v126
    %149 = vmatprep.subr.bf16.mxu0 0
    %150 = vmatpush1.bf16.msra.mxu0 %v127
    %151 = vmatprep.subr.bf16.mxu0 0
    %152 = vmatpush1.bf16.msra.mxu0 %v128
    %153 = vmatprep.subr.bf16.mxu0 0
    %154 = vmatpush1.bf16.msra.mxu0 0
    %155 = vmatprep.subr.bf16.mxu0 0
    %156 = vmatpush1.bf16.msra.mxu0 0
    %157 = vmatprep.subr.bf16.mxu0 0
    %158 = vmatpush1.bf16.msra.mxu0 0
    %159 = vmatprep.subr.bf16.mxu0 0
    %160 = vmatpush1.bf16.msra.mxu0 0
    %161 = vmatprep.subr.bf16.mxu0 0
    %162 = vmatpush1.bf16.msra.mxu0 0
    %163 = vmatprep.subr.bf16.mxu0 0
    %164 = vmatpush1.bf16.msra.mxu0 0
    %165 = vmatprep.subr.bf16.mxu0 0
    %166 = vmatpush1.bf16.msra.mxu0 0
    %167 = vmatprep.subr.bf16.mxu0 0
    %168 = vmatpush1.bf16.msra.mxu0 0
    %169 = vmatprep.mubr.bf16.mxu0 0
    %170 = vmatmul.mubr.bf16.gmra.mrb[0].mxu0 %v65
    %v171 = vpop.f32.mrb[0].mxu0
    %v172 = vadd.f32 %v87, %v171
    %v173 = vpop.f32.mrb[0].mxu0
    %v174 = vpop.f32.mrb[0].mxu0
    %v175 = vadd.f32 %v87, %v174
    %v176 = vpop.f32.mrb[0].mxu0
    %177 = vdwg.mxu0
    %v178 = vmax.f32 %v172, 0.0
    %v179 = vmax.f32 %v175, 0.0
    %v180 = vpack.c.bf16 %v179, %v178
    %v181 = vld [vmem:[#allocation7] sm:$0xf]
    %v182 = vld [vmem:[#allocation7 + $0x4] sm:$0xf]
    %v183 = vld [vmem:[#allocation7 + $0x8] sm:$0xf]
    %v184 = vld [vmem:[#allocation7 + $0xc] sm:$0xf]
    %v185 = vld [vmem:[#allocation7 + $0x10] sm:$0xf]
    %v186 = vld [vmem:[#allocation7 + $0x14] sm:$0xf]
    %v187 = vld [vmem:[#allocation7 + $0x18] sm:$0xf]
    %v188 = vld [vmem:[#allocation7 + $0x1c] sm:$0xf]
    %v189 = vld [vmem:[#allocation7 + $0x20] sm:$0xf]
    %v190 = vld [vmem:[#allocation7 + $0x24] sm:$0xf]
    %v191 = vld [vmem:[#allocation7 + $0x28] sm:$0xf]
    %v192 = vld [vmem:[#allocation7 + $0x2c] sm:$0xf]
    %v193 = vld [vmem:[#allocation7 + $0x30] sm:$0xf]
    %v194 = vld [vmem:[#allocation7 + $0x34] sm:$0xf]
    %v195 = vld [vmem:[#allocation7 + $0x38] sm:$0xf]
    %v196 = vld [vmem:[#allocation7 + $0x3c] sm:$0xf]
    %v197 = vld [vmem:[%s4] sm:$0x1]
    %v199 = vlaneseq
    %v200 = vshrl.u32 %v199, 7
    %v201 = vsub.s32 0, %v200
    %v202 = vrot.slane %v197, %v201
    %v220 = vunpack.c.l.b16 %v181
    %v221 = vunpack.c.l.b16 %v182
    %v222 = vunpack.c.l.b16 %v183
    %v223 = vunpack.c.l.b16 %v184
    %v224 = vunpack.c.l.b16 %v185
    %v225 = vunpack.c.l.b16 %v186
    %v226 = vunpack.c.l.b16 %v187
    %v227 = vunpack.c.l.b16 %v188
    %v228 = vunpack.c.l.b16 %v189
    %v229 = vunpack.c.l.b16 %v190
    %v230 = vunpack.c.l.b16 %v191
    %v231 = vunpack.c.l.b16 %v192
    %v232 = vunpack.c.l.b16 %v193
    %v233 = vunpack.c.l.b16 %v194
    %v234 = vunpack.c.l.b16 %v195
    %v235 = vunpack.c.l.b16 %v196
    %v236 = vpack.c.b16 %v221, %v220
    %v237 = vpack.c.b16 %v223, %v222
    %v238 = vpack.c.b16 %v225, %v224
    %v239 = vpack.c.b16 %v227, %v226
    %v240 = vpack.c.b16 %v229, %v228
    %v241 = vpack.c.b16 %v231, %v230
    %v242 = vpack.c.b16 %v233, %v232
    %v243 = vpack.c.b16 %v235, %v234
    %252 = vmatprep.subr.bf16.mxu0 0
    %253 = vmatpush1.bf16.msra.mxu0 %v236
    %254 = vmatprep.subr.bf16.mxu0 0
    %255 = vmatpush1.bf16.msra.mxu0 %v237
    %256 = vmatprep.subr.bf16.mxu0 0
    %257 = vmatpush1.bf16.msra.mxu0 %v238
    %258 = vmatprep.subr.bf16.mxu0 0
    %259 = vmatpush1.bf16.msra.mxu0 %v239
    %260 = vmatprep.subr.bf16.mxu0 0
    %261 = vmatpush1.bf16.msra.mxu0 %v240
    %262 = vmatprep.subr.bf16.mxu0 0
    %263 = vmatpush1.bf16.msra.mxu0 %v241
    %264 = vmatprep.subr.bf16.mxu0 0
    %265 = vmatpush1.bf16.msra.mxu0 %v242
    %266 = vmatprep.subr.bf16.mxu0 0
    %267 = vmatpush1.bf16.msra.mxu0 %v243
    %268 = vmatprep.subr.bf16.mxu0 0
    %269 = vmatpush1.bf16.msra.mxu0 0
    %270 = vmatprep.subr.bf16.mxu0 0
    %271 = vmatpush1.bf16.msra.mxu0 0
    %272 = vmatprep.subr.bf16.mxu0 0
    %273 = vmatpush1.bf16.msra.mxu0 0
    %274 = vmatprep.subr.bf16.mxu0 0
    %275 = vmatpush1.bf16.msra.mxu0 0
    %276 = vmatprep.subr.bf16.mxu0 0
    %277 = vmatpush1.bf16.msra.mxu0 0
    %278 = vmatprep.subr.bf16.mxu0 0
    %279 = vmatpush1.bf16.msra.mxu0 0
    %280 = vmatprep.subr.bf16.mxu0 0
    %281 = vmatpush1.bf16.msra.mxu0 0
    %282 = vmatprep.subr.bf16.mxu0 0
    %283 = vmatpush1.bf16.msra.mxu0 0
    %284 = vmatprep.mubr.bf16.mxu0 0
    %285 = vmatmul.mubr.bf16.gmra.mrb[0].mxu0 %v180
    %v286 = vpop.f32.mrb[0].mxu0
    %v287 = vadd.f32 %v202, %v286
    %v288 = vpop.f32.mrb[0].mxu0
    %v289 = vpop.f32.mrb[0].mxu0
    %v290 = vadd.f32 %v202, %v289
    %v291 = vpop.f32.mrb[0].mxu0
    %292 = vdwg.mxu0
    %293 = vst [vmem:[#allocation8] sm:$0xff] %v287
    %294 = vst [vmem:[#allocation8 + $0x8] sm:$0xff] %v290
    // Predicated region
    $region34: #{tpu_custom_call.1} parent=1 // pred_check
      _
    $region35: #{tpu_custom_call.1} parent=1 // pred_check_branch
      %296 = sbr.rel (0) target = $region37
    $region36: #{tpu_custom_call.1} parent=1 // pred_region
      %s298 = ssub.s32 256, 256
      %299 = vsyncadd [#allocation4], %s298
      %s300 = sshll.u32 [#allocation8], 4
      %s301 = int_to_ptr.vmem [resolvable:$true] %s300
      %306 = dma.vmem_to_hbm [thread:$0]  %s301, 256, %s5, [#allocation4], 128, 128, 8
    $region37: #{tpu_custom_call.1} parent=1 // pred_fallthru
      _
    // Predicated region
    $region38: #{tpu_custom_call.1} parent=1 // pred_check
      _
    $region39: #{tpu_custom_call.1} parent=1 // pred_check_branch
      %308 = sbr.rel (0) target = $region41
    $region40: #{tpu_custom_call.1} parent=1 // pred_region
      %309 = dma.done [#allocation4], 256
    $region41: #{tpu_custom_call.1} parent=1 // pred_fallthru
      _
    %310 = vsyncpa [#allocation3], 1
    %311 = vsyncpa [#allocation6], 1
    %312 = vsyncpa [#allocation4], 1

// kernel: tpu_custom_call.1
$region0: #{tpu_custom_call.1}
  #allocation0 [shape = 'u32[]', space=smem, size = 0x4, offset = 0x4, fixed_abs, tag = 'smem constant byte address 0x4 - core index']
  #allocation1 [shape = 'u32[144,128]{1,0:T(1,128)}', space=vmem, size = 0x12000, scoped, tag = 'internal scratch']
  %s0 = inlined_call_operand.hbm [shape: f32[16,128], index: 0, kind: input, shape index: {}]
  %s1 = inlined_call_operand.hbm [shape: bf16[128,128], index: 1, kind: input, shape index: {}]
  %s2 = inlined_call_operand.vmem [shape: f32[1,128], index: 2, kind: input, shape index: {}]
  %s3 = inlined_call_operand.hbm [shape: bf16[128,128], index: 3, kind: input, shape index: {}]
  %s4 = inlined_call_operand.vmem [shape: f32[1,128], index: 4, kind: input, shape index: {}]
  %s5 = inlined_call_operand.hbm [shape: f32[16,128], index: 5, kind: output, shape index: {}]
  %s6 = sld [smem:[#allocation0]]
  $region42: #{tpu_custom_call.1} parent=0
    _
  %s8 = ssub.s32 1, %s6
  %s9 = scalar_select 0, %s8, %s6
  $region1: #{tpu_custom_call.1} parent=0
    #allocation2 [shape = 'u8[8192]{0}', space=vmem, size = 0x2000, scoped, tag = 'input window, operand 0, single buffered']
    #allocation3 [shape = 's32[1]{0}', space=sflag, size = 0x4, scoped, tag = 'scoped memory for tpu_custom_call.1']
    #allocation4 [shape = 's32[1]{0}', space=sflag, size = 0x4, scoped, tag = 'scoped memory for tpu_custom_call.1']
    #allocation5 [shape = 'u8[32768]{0}', space=vmem, size = 0x8000, scoped, tag = 'input window, operand 1, single buffered']
    #allocation6 [shape = 's32[1]{0}', space=sflag, size = 0x4, scoped, tag = 'scoped memory for tpu_custom_call.1']
    #allocation7 [shape = 'u8[32768]{0}', space=vmem, size = 0x8000, scoped, tag = 'input window, operand 3, single buffered']
    #allocation8 [shape = 'u8[8192]{0}', space=vmem, size = 0x2000, scoped, tag = 'output window, operand 0, single buffered']
    %10 = vsyncpa [#allocation3], 0
    %11 = vsyncpa [#allocation6], 0
    %12 = vsyncpa [#allocation4], 0
    // Predicated region
    $region2: #{tpu_custom_call.1} parent=1 // pred_check
      _
    $region3: #{tpu_custom_call.1} parent=1 // pred_check_branch
      %14 = sbr.rel (0) target = $region5
    $region4: #{tpu_custom_call.1} parent=1 // pred_region
      %s16 = ssub.s32 256, 256
      %17 = vsyncadd [#allocation3], %s16
      %s18 = sshll.u32 [#allocation2], 4
      %s19 = int_to_ptr.vmem [resolvable:$true] %s18
      %24 = dma.hbm_to_vmem [thread:$0]  %s0, 256, %s19, [#allocation3], 128, 128, 8
    $region5: #{tpu_custom_call.1} parent=1 // pred_fallthru
      _
    // Predicated region
    $region6: #{tpu_custom_call.1} parent=1 // pred_check
      _
    $region7: #{tpu_custom_call.1} parent=1 // pred_check_branch
      %26 = sbr.rel (0) target = $region9
    $region8: #{tpu_custom_call.1} parent=1 // pred_region
      %s28 = ssub.s32 1024, 1024
      %29 = vsyncadd [#allocation6], %s28
      %s30 = sshll.u32 [#allocation5], 4
      %s31 = int_to_ptr.vmem [resolvable:$true] %s30
      %36 = dma.hbm_to_vmem [thread:$0]  %s1, 1024, %s31, [#allocation6], 64, 64, 4
    $region9: #{tpu_custom_call.1} parent=1 // pred_fallthru
      _
    // Predicated region
    $region10: #{tpu_custom_call.1} parent=1 // pred_check
      _
    $region11: #{tpu_custom_call.1} parent=1 // pred_check_branch
      %38 = sbr.rel (0) target = $region13
    $region12: #{tpu_custom_call.1} parent=1 // pred_region
      _
    $region13: #{tpu_custom_call.1} parent=1 // pred_fallthru
      _
    // Predicated region
    $region14: #{tpu_custom_call.1} parent=1 // pred_check
      _
    $region15: #{tpu_custom_call.1} parent=1 // pred_check_branch
      %40 = sbr.rel (0) target = $region17
    $region16: #{tpu_custom_call.1} parent=1 // pred_region
      %s42 = ssub.s32 1024, 1024
      %43 = vsyncadd [#allocation6], %s42
      %s44 = sshll.u32 [#allocation7], 4
      %s45 = int_to_ptr.vmem [resolvable:$true] %s44
      %50 = dma.hbm_to_vmem [thread:$0]  %s3, 1024, %s45, [#allocation6], 64, 64, 4
    $region17: #{tpu_custom_call.1} parent=1 // pred_fallthru
      _
    // Predicated region
    $region18: #{tpu_custom_call.1} parent=1 // pred_check
      _
    $region19: #{tpu_custom_call.1} parent=1 // pred_check_branch
      %52 = sbr.rel (0) target = $region21
    $region20: #{tpu_custom_call.1} parent=1 // pred_region
      _
    $region21: #{tpu_custom_call.1} parent=1 // pred_fallthru
      _
    // Predicated region
    $region22: #{tpu_custom_call.1} parent=1 // pred_check
      _
    $region23: #{tpu_custom_call.1} parent=1 // pred_check_branch
      %54 = sbr.rel (0) target = $region25
    $region24: #{tpu_custom_call.1} parent=1 // pred_region
      %55 = dma.done [#allocation3], 256
    $region25: #{tpu_custom_call.1} parent=1 // pred_fallthru
      _
    // Predicated region
    $region26: #{tpu_custom_call.1} parent=1 // pred_check
      _
    $region27: #{tpu_custom_call.1} parent=1 // pred_check_branch
      %57 = sbr.rel (0) target = $region29
    $region28: #{tpu_custom_call.1} parent=1 // pred_region
      %58 = dma.done [#allocation6], 1024
    $region29: #{tpu_custom_call.1} parent=1 // pred_fallthru
      _
    // Predicated region
    $region30: #{tpu_custom_call.1} parent=1 // pred_check
      _
    $region31: #{tpu_custom_call.1} parent=1 // pred_check_branch
      %60 = sbr.rel (0) target = $region33
    $region32: #{tpu_custom_call.1} parent=1 // pred_region
      %61 = dma.done [#allocation6], 1024
    $region33: #{tpu_custom_call.1} parent=1 // pred_fallthru
      _
    %v63 = vld [vmem:[#allocation2] sm:$0xff]
    %v64 = vld [vmem:[#allocation2 + $0x8] sm:$0xff]
    %v65 = vpack.c.bf16 %v64, %v63
    %v66 = vld [vmem:[#allocation5] sm:$0xf]
    %v67 = vld [vmem:[#allocation5 + $0x4] sm:$0xf]
    %v68 = vld [vmem:[#allocation5 + $0x8] sm:$0xf]
    %v69 = vld [vmem:[#allocation5 + $0xc] sm:$0xf]
    %v70 = vld [vmem:[#allocation5 + $0x10] sm:$0xf]
    %v71 = vld [vmem:[#allocation5 + $0x14] sm:$0xf]
    %v72 = vld [vmem:[#allocation5 + $0x18] sm:$0xf]
    %v73 = vld [vmem:[#allocation5 + $0x1c] sm:$0xf]
    %v74 = vld [vmem:[#allocation5 + $0x20] sm:$0xf]
    %v75 = vld [vmem:[#allocation5 + $0x24] sm:$0xf]
    %v76 = vld [vmem:[#allocation5 + $0x28] sm:$0xf]
    %v77 = vld [vmem:[#allocation5 + $0x2c] sm:$0xf]
    %v78 = vld [vmem:[#allocation5 + $0x30] sm:$0xf]
    %v79 = vld [vmem:[#allocation5 + $0x34] sm:$0xf]
    %v80 = vld [vmem:[#allocation5 + $0x38] sm:$0xf]
    %v81 = vld [vmem:[#allocation5 + $0x3c] sm:$0xf]
    %v82 = vld [vmem:[%s2] sm:$0x1]
    %v84 = vlaneseq
    %v85 = vshrl.u32 %v84, 7
    %v86 = vsub.s32 0, %v85
    %v87 = vrot.slane %v82, %v86
    %v105 = vunpack.c.l.b16 %v66
    %v106 = vunpack.c.l.b16 %v67
    %v107 = vunpack.c.l.b16 %v68
    %v108 = vunpack.c.l.b16 %v69
    %v109 = vunpack.c.l.b16 %v70
    %v110 = vunpack.c.l.b16 %v71
    %v111 = vunpack.c.l.b16 %v72
    %v112 = vunpack.c.l.b16 %v73
    %v113 = vunpack.c.l.b16 %v74
    %v114 = vunpack.c.l.b16 %v75
    %v115 = vunpack.c.l.b16 %v76
    %v116 = vunpack.c.l.b16 %v77
    %v117 = vunpack.c.l.b16 %v78
    %v118 = vunpack.c.l.b16 %v79
    %v119 = vunpack.c.l.b16 %v80
    %v120 = vunpack.c.l.b16 %v81
    %v121 = vpack.c.b16 %v106, %v105
    %v122 = vpack.c.b16 %v108, %v107
    %v123 = vpack.c.b16 %v110, %v109
    %v124 = vpack.c.b16 %v112, %v111
    %v125 = vpack.c.b16 %v114, %v113
    %v126 = vpack.c.b16 %v116, %v115
    %v127 = vpack.c.b16 %v118, %v117
    %v128 = vpack.c.b16 %v120, %v119
    %137 = vmatprep.subr.bf16.mxu0 0
    %138 = vmatpush1.bf16.msra.mxu0 %v121
    %139 = vmatprep.subr.bf16.mxu0 0
    %140 = vmatpush1.bf16.msra.mxu0 %v122
    %141 = vmatprep.subr.bf16.mxu0 0
    %142 = vmatpush1.bf16.msra.mxu0 %v123
    %143 = vmatprep.subr.bf16.mxu0 0
    %144 = vmatpush1.bf16.msra.mxu0 %v124
    %145 = vmatprep.subr.bf16.mxu0 0
    %146 = vmatpush1.bf16.msra.mxu0 %v125
    %147 = vmatprep.subr.bf16.mxu0 0
    %148 = vmatpush1.bf16.msra.mxu0 %v126
    %149 = vmatprep.subr.bf16.mxu0 0
    %150 = vmatpush1.bf16.msra.mxu0 %v127
    %151 = vmatprep.subr.bf16.mxu0 0
    %152 = vmatpush1.bf16.msra.mxu0 %v128
    %153 = vmatprep.subr.bf16.mxu0 0
    %154 = vmatpush1.bf16.msra.mxu0 0
    %155 = vmatprep.subr.bf16.mxu0 0
    %156 = vmatpush1.bf16.msra.mxu0 0
    %157 = vmatprep.subr.bf16.mxu0 0
    %158 = vmatpush1.bf16.msra.mxu0 0
    %159 = vmatprep.subr.bf16.mxu0 0
    %160 = vmatpush1.bf16.msra.mxu0 0
    %161 = vmatprep.subr.bf16.mxu0 0
    %162 = vmatpush1.bf16.msra.mxu0 0
    %163 = vmatprep.subr.bf16.mxu0 0
    %164 = vmatpush1.bf16.msra.mxu0 0
    %165 = vmatprep.subr.bf16.mxu0 0
    %166 = vmatpush1.bf16.msra.mxu0 0
    %167 = vmatprep.subr.bf16.mxu0 0
    %168 = vmatpush1.bf16.msra.mxu0 0
    %169 = vmatprep.mubr.bf16.mxu0 0
    %170 = vmatmul.mubr.bf16.gmra.mrb[0].mxu0 %v65
    %v171 = vpop.f32.mrb[0].mxu0
    %v172 = vadd.f32 %v87, %v171
    %v173 = vpop.f32.mrb[0].mxu0
    %v174 = vpop.f32.mrb[0].mxu0
    %v175 = vadd.f32 %v87, %v174
    %v176 = vpop.f32.mrb[0].mxu0
    %177 = vdwg.mxu0
    %v178 = vmax.f32 %v172, 0.0
    %v179 = vmax.f32 %v175, 0.0
    %v180 = vpack.c.bf16 %v179, %v178
    %v181 = vld [vmem:[#allocation7] sm:$0xf]
    %v182 = vld [vmem:[#allocation7 + $0x4] sm:$0xf]
    %v183 = vld [vmem:[#allocation7 + $0x8] sm:$0xf]
    %v184 = vld [vmem:[#allocation7 + $0xc] sm:$0xf]
    %v185 = vld [vmem:[#allocation7 + $0x10] sm:$0xf]
    %v186 = vld [vmem:[#allocation7 + $0x14] sm:$0xf]
    %v187 = vld [vmem:[#allocation7 + $0x18] sm:$0xf]
    %v188 = vld [vmem:[#allocation7 + $0x1c] sm:$0xf]
    %v189 = vld [vmem:[#allocation7 + $0x20] sm:$0xf]
    %v190 = vld [vmem:[#allocation7 + $0x24] sm:$0xf]
    %v191 = vld [vmem:[#allocation7 + $0x28] sm:$0xf]
    %v192 = vld [vmem:[#allocation7 + $0x2c] sm:$0xf]
    %v193 = vld [vmem:[#allocation7 + $0x30] sm:$0xf]
    %v194 = vld [vmem:[#allocation7 + $0x34] sm:$0xf]
    %v195 = vld [vmem:[#allocation7 + $0x38] sm:$0xf]
    %v196 = vld [vmem:[#allocation7 + $0x3c] sm:$0xf]
    %v197 = vld [vmem:[%s4] sm:$0x1]
    %v199 = vlaneseq
    %v200 = vshrl.u32 %v199, 7
    %v201 = vsub.s32 0, %v200
    %v202 = vrot.slane %v197, %v201
    %v220 = vunpack.c.l.b16 %v181
    %v221 = vunpack.c.l.b16 %v182
    %v222 = vunpack.c.l.b16 %v183
    %v223 = vunpack.c.l.b16 %v184
    %v224 = vunpack.c.l.b16 %v185
    %v225 = vunpack.c.l.b16 %v186
    %v226 = vunpack.c.l.b16 %v187
    %v227 = vunpack.c.l.b16 %v188
    %v228 = vunpack.c.l.b16 %v189
    %v229 = vunpack.c.l.b16 %v190
    %v230 = vunpack.c.l.b16 %v191
    %v231 = vunpack.c.l.b16 %v192
    %v232 = vunpack.c.l.b16 %v193
    %v233 = vunpack.c.l.b16 %v194
    %v234 = vunpack.c.l.b16 %v195
    %v235 = vunpack.c.l.b16 %v196
    %v236 = vpack.c.b16 %v221, %v220
    %v237 = vpack.c.b16 %v223, %v222
    %v238 = vpack.c.b16 %v225, %v224
    %v239 = vpack.c.b16 %v227, %v226
    %v240 = vpack.c.b16 %v229, %v228
    %v241 = vpack.c.b16 %v231, %v230
    %v242 = vpack.c.b16 %v233, %v232
    %v243 = vpack.c.b16 %v235, %v234
    %252 = vmatprep.subr.bf16.mxu0 0
    %253 = vmatpush1.bf16.msra.mxu0 %v236
    %254 = vmatprep.subr.bf16.mxu0 0
    %255 = vmatpush1.bf16.msra.mxu0 %v237
    %256 = vmatprep.subr.bf16.mxu0 0
    %257 = vmatpush1.bf16.msra.mxu0 %v238
    %258 = vmatprep.subr.bf16.mxu0 0
    %259 = vmatpush1.bf16.msra.mxu0 %v239
    %260 = vmatprep.subr.bf16.mxu0 0
    %261 = vmatpush1.bf16.msra.mxu0 %v240
    %262 = vmatprep.subr.bf16.mxu0 0
    %263 = vmatpush1.bf16.msra.mxu0 %v241
    %264 = vmatprep.subr.bf16.mxu0 0
    %265 = vmatpush1.bf16.msra.mxu0 %v242
    %266 = vmatprep.subr.bf16.mxu0 0
    %267 = vmatpush1.bf16.msra.mxu0 %v243
    %268 = vmatprep.subr.bf16.mxu0 0
    %269 = vmatpush1.bf16.msra.mxu0 0
    %270 = vmatprep.subr.bf16.mxu0 0
    %271 = vmatpush1.bf16.msra.mxu0 0
    %272 = vmatprep.subr.bf16.mxu0 0
    %273 = vmatpush1.bf16.msra.mxu0 0
    %274 = vmatprep.subr.bf16.mxu0 0
    %275 = vmatpush1.bf16.msra.mxu0 0
    %276 = vmatprep.subr.bf16.mxu0 0
    %277 = vmatpush1.bf16.msra.mxu0 0
    %278 = vmatprep.subr.bf16.mxu0 0
    %279 = vmatpush1.bf16.msra.mxu0 0
    %280 = vmatprep.subr.bf16.mxu0 0
    %281 = vmatpush1.bf16.msra.mxu0 0
    %282 = vmatprep.subr.bf16.mxu0 0
    %283 = vmatpush1.bf16.msra.mxu0 0
    %284 = vmatprep.mubr.bf16.mxu0 0
    %285 = vmatmul.mubr.bf16.gmra.mrb[0].mxu0 %v180
    %v286 = vpop.f32.mrb[0].mxu0
    %v287 = vadd.f32 %v202, %v286
    %v288 = vpop.f32.mrb[0].mxu0
    %v289 = vpop.f32.mrb[0].mxu0
    %v290 = vadd.f32 %v202, %v289
    %v291 = vpop.f32.mrb[0].mxu0
    %292 = vdwg.mxu0
    %293 = vst [vmem:[#allocation8] sm:$0xff] %v287
    %294 = vst [vmem:[#allocation8 + $0x8] sm:$0xff] %v290
    // Predicated region
    $region34: #{tpu_custom_call.1} parent=1 // pred_check
      _
    $region35: #{tpu_custom_call.1} parent=1 // pred_check_branch
      %296 = sbr.rel (0) target = $region37
    $region36: #{tpu_custom_call.1} parent=1 // pred_region
      %s298 = ssub.s32 256, 256
      %299 = vsyncadd [#allocation4], %s298
      %s300 = sshll.u32 [#allocation8], 4
      %s301 = int_to_ptr.vmem [resolvable:$true] %s300
      %306 = dma.vmem_to_hbm [thread:$0]  %s301, 256, %s5, [#allocation4], 128, 128, 8
    $region37: #{tpu_custom_call.1} parent=1 // pred_fallthru
      _
    // Predicated region
    $region38: #{tpu_custom_call.1} parent=1 // pred_check
      _
    $region39: #{tpu_custom_call.1} parent=1 // pred_check_branch
      %308 = sbr.rel (0) target = $region41
    $region40: #{tpu_custom_call.1} parent=1 // pred_region
      %309 = dma.done [#allocation4], 256
    $region41: #{tpu_custom_call.1} parent=1 // pred_fallthru
      _
    %310 = vsyncpa [#allocation3], 1
    %311 = vsyncpa [#allocation6], 1
    %312 = vsyncpa [#allocation4], 1

</llo_original>
